<compile_context>
chip_gen: v5e
topology: v5e:2x2
jax: 0.10.0
libtpu: 0.0.40
codegen_flags: <defaults>
</compile_context>

<pallas_src>
import functools

import jax
import jax.numpy as jnp
from jax.experimental import pallas as pl
from jax.experimental.pallas import tpu as pltpu

BN_EPS = 1e-5
EMBED_DIM = 64   # seq_embed_size (60) + mod_embed_size (4)
CH_PAD = 64      # all conv channel dims padded to 64 (lane-dense)


# -----------------------------------------------------------------------------
# Pallas kernel
# -----------------------------------------------------------------------------
def deepintra_kernel(
    a_ref, b_ref,                       # (BB*Lp, 64) flattened, length-padded peptides
    w1_ref, b1_ref,                     # conv1 im2col weight (192, 64), bias (1, 64)  [BN folded]
    w2_ref, b2_ref,                     # conv2 (192, 64), (1, 64)
    w3_ref, b3_ref,                     # conv3 (192, 64), (1, 64)
    prelu_ref,                          # (3,) PReLU alphas in SMEM
    wa_ref, wb_ref, bh_ref,             # folded attention+fc1: (64,H), (64,H), (1,H)
    wf2_ref, bf2_ref,                   # fc2 row: (1, H), bias (1, 1)
    out_ref,                            # (BB, 1)
    *, n_pairs, l_pad, l_valid):

  # Stack alpha / beta rows: (2*BB*Lp, 64).  Rows [p*Lp, p*Lp+L) are real data,
  # the tail of each sample is padding whose conv outputs are garbage but are
  # never read by valid positions of later layers nor by the max-pool.
  x = jnp.concatenate([a_ref[...], b_ref[...]], axis=0)

  def shift_rows(v, k):
    # v shifted up by k rows (wrap-around).  Wrapped/cross-sample rows only ever
    # land in positions that are never consumed downstream (see validity window).
    if k == 0:
      return v
    return jnp.concatenate([v[k:, :], v[:k, :]], axis=0)

  # Conv1d(k=3) x3 with folded BN + PReLU, as one (M,192)@(192,64) matmul each.
  for i, (w_ref, bias_ref) in enumerate(
      ((w1_ref, b1_ref), (w2_ref, b2_ref), (w3_ref, b3_ref))):
    xcat = jnp.concatenate([x, shift_rows(x, 1), shift_rows(x, 2)], axis=1)  # (M, 192)
    y = jnp.dot(xcat, w_ref[...], preferred_element_type=jnp.float32) + bias_ref[...]
    alpha = prelu_ref[i]                                   # scalar PReLU parameter
    x = jnp.where(y > 0, y, alpha * y)

  # AdaptiveMaxPool1d(1): max over the valid length positions of each sample.
  # Static slices (per sample) + concat; alpha samples occupy the first BB
  # segments, beta samples the next BB segments.
  def pool(sample_off):
    return jnp.concatenate(
        [jnp.max(x[(sample_off + s) * l_pad:(sample_off + s) * l_pad + l_valid, :],
                 axis=0, keepdims=True)
         for s in range(n_pairs)], axis=0)                 # (BB, 64)

  feat_a = pool(0)                                         # alpha pooled features
  feat_b = pool(n_pairs)                                   # beta pooled features

  # MultiheadAttention with a single query/key position: softmax == 1, so
  # attn(q, kv) = out_proj(v_proj(kv)).  That linear map, the [ab, ba] concat
  # and fc1 are folded host-side into wa (alpha path), wb (beta path), bh.
  # TODO(synk): attention dropout (dropout1) is a no-op in eval mode.
  h = jnp.tanh(
      jnp.dot(feat_a, wa_ref[...], preferred_element_type=jnp.float32)
      + jnp.dot(feat_b, wb_ref[...], preferred_element_type=jnp.float32)
      + bh_ref[...])
  # TODO(synk): fc dropout (dropout2) is a no-op in eval mode.
  # fc2 has one output column -> VPU lane-reduction instead of a 1-column MXU push.
  out_ref[...] = jnp.sum(h * wf2_ref[...], axis=1, keepdims=True) + bf2_ref[...]


# -----------------------------------------------------------------------------
# Wrapper
# -----------------------------------------------------------------------------
def deepintra_pallas(a_emb, b_emb, kargs, *, block_pairs=None):
  B, L, C = a_emb.shape
  assert C == EMBED_DIM and L >= 7
  l_pad = ((L + 7) // 8) * 8                 # per-sample length padded to x8
  if l_pad > L:
    cfg = ((0, 0), (0, l_pad - L), (0, 0))
    a_emb = jnp.pad(a_emb, cfg)
    b_emb = jnp.pad(b_emb, cfg)
  a_flat = a_emb.reshape(B * l_pad, C).astype(jnp.float32)
  b_flat = b_emb.reshape(B * l_pad, C).astype(jnp.float32)

  if block_pairs is None:
    # Prefer multiples of 8 (tile-friendly output block, bigger MXU M, fewer
    # grid steps); otherwise run the whole batch as one block (small B).
    block_pairs = B
    for cand in (32, 16, 8):
      if B % cand == 0:
        block_pairs = cand
        break
  assert B % block_pairs == 0
  nb = B // block_pairs

  def full_spec(shape):
    nd = len(shape)
    return pl.BlockSpec(shape, lambda i, nd=nd: (0,) * nd)  # weights: constant block

  seq_spec = pl.BlockSpec((block_pairs * l_pad, C), lambda i: (i, 0))
  smem_spec = pl.BlockSpec(memory_space=pltpu.MemorySpace.SMEM)

  (w1, b1, w2, b2, w3, b3, prelu, wa, wb, bh, wf2, bf2) = kargs
  in_specs = [seq_spec, seq_spec,
              full_spec(w1.shape), full_spec(b1.shape),
              full_spec(w2.shape), full_spec(b2.shape),
              full_spec(w3.shape), full_spec(b3.shape),
              smem_spec,
              full_spec(wa.shape), full_spec(wb.shape), full_spec(bh.shape),
              full_spec(wf2.shape), full_spec(bf2.shape)]

  kernel = functools.partial(deepintra_kernel, n_pairs=block_pairs,
                             l_pad=l_pad, l_valid=L - 6)

  H = wa.shape[1]
  m_rows = 2 * B * l_pad
  flops = 2 * m_rows * (3 * CH_PAD) * CH_PAD * 3 + 2 * 2 * B * CH_PAD * H
  bytes_acc = 4 * (2 * B * l_pad * C + sum(int(v.size) for v in kargs) + B)
  cost = pl.CostEstimate(flops=int(flops), transcendentals=int(B * H),
                         bytes_accessed=int(bytes_acc))

  return pl.pallas_call(
      kernel,
      out_shape=jax.ShapeDtypeStruct((B, 1), jnp.float32),
      grid=(nb,),
      in_specs=in_specs,
      out_specs=pl.BlockSpec((block_pairs, 1), lambda i: (i, 0)),
      compiler_params=pltpu.CompilerParams(
          dimension_semantics=("parallel",)),
      cost_estimate=cost,
  )(a_flat, b_flat, w1, b1, w2, b2, w3, b3, prelu, wa, wb, bh, wf2, bf2)


# -----------------------------------------------------------------------------
# Deterministic parameter init (shapes match the PyTorch module __init__)
# -----------------------------------------------------------------------------
def init_params(key, conv_batch_1, conv_batch_2, hidden_layer_dim):
  ks = iter(jax.random.split(key, 40))
  p = {}
  p['pep_table'] = 0.1 * jax.random.normal(next(ks), (26, 60), jnp.float32)
  p['mod_table'] = 0.1 * jax.random.normal(next(ks), (4, 4), jnp.float32)
  ic = EMBED_DIM
  for i, oc in enumerate([conv_batch_1, conv_batch_2, 64]):
    p[f'conv{i}_w'] = 0.1 * jax.random.normal(next(ks), (oc, ic, 3), jnp.float32)
    p[f'conv{i}_b'] = 0.1 * jax.random.normal(next(ks), (oc,), jnp.float32)
    p[f'bn{i}_g'] = 1.0 + 0.1 * jax.random.normal(next(ks), (oc,), jnp.float32)
    p[f'bn{i}_b'] = 0.1 * jax.random.normal(next(ks), (oc,), jnp.float32)
    p[f'bn{i}_m'] = 0.1 * jax.random.normal(next(ks), (oc,), jnp.float32)
    p[f'bn{i}_v'] = 0.9 + 0.1 * jnp.abs(jax.random.normal(next(ks), (oc,), jnp.float32))
    p[f'prelu{i}'] = jnp.float32(0.25)
    ic = oc
  for name in ('wq', 'wk', 'wv', 'wo'):
    p[name] = 0.1 * jax.random.normal(next(ks), (64, 64), jnp.float32)
  for name in ('bq', 'bk', 'bv', 'bo'):
    p[name] = 0.1 * jax.random.normal(next(ks), (64,), jnp.float32)
  p['fc1_w'] = 0.1 * jax.random.normal(next(ks), (hidden_layer_dim, 128), jnp.float32)
  p['fc1_b'] = 0.1 * jax.random.normal(next(ks), (hidden_layer_dim,), jnp.float32)
  p['fc2_w'] = 0.1 * jax.random.normal(next(ks), (1, hidden_layer_dim), jnp.float32)
  p['fc2_b'] = 0.1 * jax.random.normal(next(ks), (1,), jnp.float32)
  return p


def embed(p, pep, mod):
  # nn.Embedding + cat(dim=2); kept as JAX glue (gather).  -> (B, L, 64)
  return jnp.concatenate([p['pep_table'][pep], p['mod_table'][mod]],
                         axis=-1).astype(jnp.float32)


def pack_kernel_params(p):
  """Fold eval-mode BN into the conv weights, im2col-pack the 3 taps, zero-pad
  channels to 64, and fold the (seq_len==1) attention block + fc1 into two
  (64, H) matrices plus one bias (exact algebra: everything there is linear)."""
  args = []
  for i in range(3):
    w, b = p[f'conv{i}_w'], p[f'conv{i}_b']               # (Cout, Cin, 3), (Cout,)
    cout, cin, _ = w.shape
    assert cin <= CH_PAD and cout <= CH_PAD
    s = p[f'bn{i}_g'] / jnp.sqrt(p[f'bn{i}_v'] + BN_EPS)
    wf = w * s[:, None, None]                             # BN scale folded into weight
    bf = (b - p[f'bn{i}_m']) * s + p[f'bn{i}_b']          # conv bias + BN shift
    wt = jnp.transpose(wf, (2, 1, 0))                     # (3, Cin, Cout)
    wp = jnp.zeros((3, CH_PAD, CH_PAD), jnp.float32).at[:, :cin, :cout].set(wt)
    args.append(wp.reshape(3 * CH_PAD, CH_PAD))           # (192, 64) im2col weight
    args.append(jnp.zeros((1, CH_PAD), jnp.float32).at[0, :cout].set(bf))
  args.append(jnp.stack([p['prelu0'], p['prelu1'], p['prelu2']]).astype(jnp.float32))
  # Single key position: attn(q, kv) = kv @ (Wv^T Wo^T) + (bv Wo^T + bo).
  wvo = p['wv'].T @ p['wo'].T                              # (64, 64)
  bvo = p['bv'] @ p['wo'].T + p['bo']                      # (64,)
  # fc1 applied to cat([ab, ba]):  h_pre = ab @ T_top + ba @ T_bot + fc1_b,
  # with ab = feat_b @ wvo + bvo and ba = feat_a @ wvo + bvo.  Fold:
  t_top = p['fc1_w'][:, :64].T                             # (64, H)
  t_bot = p['fc1_w'][:, 64:].T                             # (64, H)
  args.append(wvo @ t_bot)                                 # wa: applied to alpha feats
  args.append(wvo @ t_top)                                 # wb: applied to beta feats
  args.append((bvo @ (t_top + t_bot) + p['fc1_b'])[None, :])   # (1, H)
  args.append(p['fc2_w'])                                  # (1, H) row for VPU reduce
  args.append(p['fc2_b'][None, :])                         # (1, 1)
  return args


# -----------------------------------------------------------------------------
# Pure-JAX reference (direct transcription of the PyTorch forward, eval mode)
# -----------------------------------------------------------------------------
def ref_forward(p, alpha_pep, beta_pep, alpha_mod, beta_mod, num_heads):
  def conv_tower(x):                                      # x: (B, L, 64) channels-last
    for i in range(3):
      w, b = p[f'conv{i}_w'], p[f'conv{i}_b']
      lout = x.shape[1] - 2
      y = jnp.zeros((x.shape[0], lout, w.shape[0]), jnp.float32)
      for k in range(3):
        y = y + jnp.einsum('blc,oc->blo', x[:, k:k + lout, :], w[:, :, k])
      y = y + b[None, None, :]
      y = (y - p[f'bn{i}_m']) / jnp.sqrt(p[f'bn{i}_v'] + BN_EPS) * p[f'bn{i}_g'] + p[f'bn{i}_b']
      x = jnp.where(y > 0, y, p[f'prelu{i}'] * y)
    return jnp.max(x, axis=1)                             # (B, 64)

  def mha(qin, kvin):
    q = qin @ p['wq'].T + p['bq']
    k = kvin @ p['wk'].T + p['bk']
    v = kvin @ p['wv'].T + p['bv']
    B = q.shape[0]
    hd = 64 // num_heads
    qh = q.reshape(B, num_heads, hd)
    kh = k.reshape(B, num_heads, hd)
    vh = v.reshape(B, num_heads, hd)
    logits = jnp.sum(qh * kh, axis=-1, keepdims=True) / jnp.sqrt(float(hd))
    attn = jax.nn.softmax(logits, axis=-1)                # single key -> all ones
    o = (attn * vh).reshape(B, 64)
    return o @ p['wo'].T + p['bo']

  af = conv_tower(embed(p, alpha_pep, alpha_mod))
  bf = conv_tower(embed(p, beta_pep, beta_mod))
  ab = mha(af, bf)
  ba = mha(bf, af)
  cat = jnp.concatenate([ab, ba], axis=1)
  h = jnp.tanh(cat @ p['fc1_w'].T + p['fc1_b'])
  return h @ p['fc2_w'].T + p['fc2_b']


# -----------------------------------------------------------------------------
if __name__ == "__main__":
  B, L = 2, 16
  conv_batch_1, conv_batch_2 = 32, 48
  hidden_layer_dim, num_heads = 32, 4

  key = jax.random.PRNGKey(0)
  kp, kd = jax.random.split(key)
  params = init_params(kp, conv_batch_1, conv_batch_2, hidden_layer_dim)

  k1, k2, k3, k4 = jax.random.split(kd, 4)
  alpha_peptide = jax.random.randint(k1, (B, L), 0, 26)   # indices into Embedding(26, 60)
  beta_peptide = jax.random.randint(k2, (B, L), 0, 26)
  alpha_mod = jax.random.randint(k3, (B, L), 0, 4)        # indices into Embedding(4, 4)
  beta_mod = jax.random.randint(k4, (B, L), 0, 4)

  a_emb = embed(params, alpha_peptide, alpha_mod)         # (B, L, 64)
  b_emb = embed(params, beta_peptide, beta_mod)
  kargs = pack_kernel_params(params)

  out = deepintra_pallas(a_emb, b_emb, kargs)
  out = jax.block_until_ready(out)

  ref = ref_forward(params, alpha_peptide, beta_peptide, alpha_mod, beta_mod, num_heads)
  assert out.shape == (B, 1), out.shape
  if not bool(jnp.allclose(out, ref, atol=1e-4, rtol=1e-4)):
    raise AssertionError(f"mismatch: pallas={out}, ref={ref}")
  print("KERNEL_OK")
</pallas_src>

<mosaic_0001>
module attributes {stable_mosaic.version = 11 : i64} {
  func.func @deepintra_kernel(%arg0: i32, %arg1: memref<32x64xf32, #tpu.memory_space<vmem>>, %arg2: memref<32x64xf32, #tpu.memory_space<vmem>>, %arg3: memref<192x64xf32, #tpu.memory_space<vmem>>, %arg4: memref<1x64xf32, #tpu.memory_space<vmem>>, %arg5: memref<192x64xf32, #tpu.memory_space<vmem>>, %arg6: memref<1x64xf32, #tpu.memory_space<vmem>>, %arg7: memref<192x64xf32, #tpu.memory_space<vmem>>, %arg8: memref<1x64xf32, #tpu.memory_space<vmem>>, %arg9: memref<3xf32, #tpu.memory_space<smem>>, %arg10: memref<64x32xf32, #tpu.memory_space<vmem>>, %arg11: memref<64x32xf32, #tpu.memory_space<vmem>>, %arg12: memref<1x32xf32, #tpu.memory_space<vmem>>, %arg13: memref<1x32xf32, #tpu.memory_space<vmem>>, %arg14: memref<1x1xf32, #tpu.memory_space<vmem>>, %arg15: memref<2x1xf32, #tpu.memory_space<vmem>>) attributes {dimension_semantics = [#tpu.dimension_semantics<parallel>], iteration_bounds = array<i64: 1>, scalar_prefetch = 0 : i64, scratch_operands = 0 : i64, tpu.core_type = #tpu.core_type<tc>, window_params = [{transform_indices = @transform_0, window_bounds = array<i64: 32, 64>}, {transform_indices = @transform_1, window_bounds = array<i64: 32, 64>}, {pipeline_mode = #tpu.pipeline_mode<synchronous>, transform_indices = @transform_2, window_bounds = array<i64: 192, 64>}, {pipeline_mode = #tpu.pipeline_mode<synchronous>, transform_indices = @transform_3, window_bounds = array<i64: 1, 64>}, {pipeline_mode = #tpu.pipeline_mode<synchronous>, transform_indices = @transform_4, window_bounds = array<i64: 192, 64>}, {pipeline_mode = #tpu.pipeline_mode<synchronous>, transform_indices = @transform_5, window_bounds = array<i64: 1, 64>}, {pipeline_mode = #tpu.pipeline_mode<synchronous>, transform_indices = @transform_6, window_bounds = array<i64: 192, 64>}, {pipeline_mode = #tpu.pipeline_mode<synchronous>, transform_indices = @transform_7, window_bounds = array<i64: 1, 64>}, {transform_indices = @transform_8, window_bounds = array<i64: 3>}, {pipeline_mode = #tpu.pipeline_mode<synchronous>, transform_indices = @transform_9, window_bounds = array<i64: 64, 32>}, {pipeline_mode = #tpu.pipeline_mode<synchronous>, transform_indices = @transform_10, window_bounds = array<i64: 64, 32>}, {pipeline_mode = #tpu.pipeline_mode<synchronous>, transform_indices = @transform_11, window_bounds = array<i64: 1, 32>}, {pipeline_mode = #tpu.pipeline_mode<synchronous>, transform_indices = @transform_12, window_bounds = array<i64: 1, 32>}, {pipeline_mode = #tpu.pipeline_mode<synchronous>, transform_indices = @transform_13, window_bounds = array<i64: 1, 1>}, {transform_indices = @transform_14, window_bounds = array<i64: 2, 1>}]} {
    %c0 = arith.constant 0 : index
    %c0_0 = arith.constant 0 : index
    %0 = vector.load %arg1[%c0, %c0_0] : memref<32x64xf32, #tpu.memory_space<vmem>>, vector<32x64xf32>
    %c0_1 = arith.constant 0 : index
    %c0_2 = arith.constant 0 : index
    %1 = vector.load %arg2[%c0_1, %c0_2] : memref<32x64xf32, #tpu.memory_space<vmem>>, vector<32x64xf32>
    %2 = tpu.concatenate %0, %1 in 0 : vector<32x64xf32>, vector<32x64xf32> -> vector<64x64xf32>
    %3 = vector.extract_strided_slice %2 {offsets = [1, 0], sizes = [63, 64], strides = [1, 1]} : vector<64x64xf32> to vector<63x64xf32>
    %4 = vector.extract_strided_slice %2 {offsets = [0, 0], sizes = [1, 64], strides = [1, 1]} : vector<64x64xf32> to vector<1x64xf32>
    %5 = tpu.concatenate %3, %4 in 0 : vector<63x64xf32>, vector<1x64xf32> -> vector<64x64xf32>
    %6 = vector.extract_strided_slice %2 {offsets = [2, 0], sizes = [62, 64], strides = [1, 1]} : vector<64x64xf32> to vector<62x64xf32>
    %7 = vector.extract_strided_slice %2 {offsets = [0, 0], sizes = [2, 64], strides = [1, 1]} : vector<64x64xf32> to vector<2x64xf32>
    %8 = tpu.concatenate %6, %7 in 0 : vector<62x64xf32>, vector<2x64xf32> -> vector<64x64xf32>
    %9 = tpu.concatenate %2, %5, %8 in 1 : vector<64x64xf32>, vector<64x64xf32>, vector<64x64xf32> -> vector<64x192xf32>
    %c0_3 = arith.constant 0 : index
    %c0_4 = arith.constant 0 : index
    %10 = vector.load %arg3[%c0_3, %c0_4] : memref<192x64xf32, #tpu.memory_space<vmem>>, vector<192x64xf32>
    %cst = arith.constant dense<0.000000e+00> : vector<64x64xf32>
    %11 = tpu.matmul %9, %10, %cst {dimension_numbers = #tpu.dot_dimension_numbers<[1], [0], [0], [1], [0, 0, 1, 1], [], []>} : vector<64x192xf32>, vector<192x64xf32>, vector<64x64xf32> -> vector<64x64xf32>
    %c0_5 = arith.constant 0 : index
    %c0_6 = arith.constant 0 : index
    %12 = vector.load %arg4[%c0_5, %c0_6] : memref<1x64xf32, #tpu.memory_space<vmem>>, vector<1x64xf32>
    %13 = vector.broadcast %12 : vector<1x64xf32> to vector<64x64xf32>
    %14 = arith.addf %11, %13 : vector<64x64xf32>
    %c0_7 = arith.constant 0 : index
    %15 = memref.load %arg9[%c0_7] : memref<3xf32, #tpu.memory_space<smem>>
    %cst_8 = arith.constant 0.000000e+00 : f32
    %16 = vector.broadcast %cst_8 : f32 to vector<64x64xf32>
    %17 = arith.cmpf ogt, %14, %16 : vector<64x64xf32>
    %18 = vector.broadcast %15 : f32 to vector<64x64xf32>
    %19 = arith.mulf %18, %14 : vector<64x64xf32>
    %20 = arith.select %17, %14, %19 : vector<64x64xi1>, vector<64x64xf32>
    %21 = vector.extract_strided_slice %20 {offsets = [1, 0], sizes = [63, 64], strides = [1, 1]} : vector<64x64xf32> to vector<63x64xf32>
    %22 = vector.extract_strided_slice %20 {offsets = [0, 0], sizes = [1, 64], strides = [1, 1]} : vector<64x64xf32> to vector<1x64xf32>
    %23 = tpu.concatenate %21, %22 in 0 : vector<63x64xf32>, vector<1x64xf32> -> vector<64x64xf32>
    %24 = vector.extract_strided_slice %20 {offsets = [2, 0], sizes = [62, 64], strides = [1, 1]} : vector<64x64xf32> to vector<62x64xf32>
    %25 = vector.extract_strided_slice %20 {offsets = [0, 0], sizes = [2, 64], strides = [1, 1]} : vector<64x64xf32> to vector<2x64xf32>
    %26 = tpu.concatenate %24, %25 in 0 : vector<62x64xf32>, vector<2x64xf32> -> vector<64x64xf32>
    %27 = tpu.concatenate %20, %23, %26 in 1 : vector<64x64xf32>, vector<64x64xf32>, vector<64x64xf32> -> vector<64x192xf32>
    %c0_9 = arith.constant 0 : index
    %c0_10 = arith.constant 0 : index
    %28 = vector.load %arg5[%c0_9, %c0_10] : memref<192x64xf32, #tpu.memory_space<vmem>>, vector<192x64xf32>
    %cst_11 = arith.constant dense<0.000000e+00> : vector<64x64xf32>
    %29 = tpu.matmul %27, %28, %cst_11 {dimension_numbers = #tpu.dot_dimension_numbers<[1], [0], [0], [1], [0, 0, 1, 1], [], []>} : vector<64x192xf32>, vector<192x64xf32>, vector<64x64xf32> -> vector<64x64xf32>
    %c0_12 = arith.constant 0 : index
    %c0_13 = arith.constant 0 : index
    %30 = vector.load %arg6[%c0_12, %c0_13] : memref<1x64xf32, #tpu.memory_space<vmem>>, vector<1x64xf32>
    %31 = vector.broadcast %30 : vector<1x64xf32> to vector<64x64xf32>
    %32 = arith.addf %29, %31 : vector<64x64xf32>
    %c1 = arith.constant 1 : index
    %33 = memref.load %arg9[%c1] : memref<3xf32, #tpu.memory_space<smem>>
    %cst_14 = arith.constant 0.000000e+00 : f32
    %34 = vector.broadcast %cst_14 : f32 to vector<64x64xf32>
    %35 = arith.cmpf ogt, %32, %34 : vector<64x64xf32>
    %36 = vector.broadcast %33 : f32 to vector<64x64xf32>
    %37 = arith.mulf %36, %32 : vector<64x64xf32>
    %38 = arith.select %35, %32, %37 : vector<64x64xi1>, vector<64x64xf32>
    %39 = vector.extract_strided_slice %38 {offsets = [1, 0], sizes = [63, 64], strides = [1, 1]} : vector<64x64xf32> to vector<63x64xf32>
    %40 = vector.extract_strided_slice %38 {offsets = [0, 0], sizes = [1, 64], strides = [1, 1]} : vector<64x64xf32> to vector<1x64xf32>
    %41 = tpu.concatenate %39, %40 in 0 : vector<63x64xf32>, vector<1x64xf32> -> vector<64x64xf32>
    %42 = vector.extract_strided_slice %38 {offsets = [2, 0], sizes = [62, 64], strides = [1, 1]} : vector<64x64xf32> to vector<62x64xf32>
    %43 = vector.extract_strided_slice %38 {offsets = [0, 0], sizes = [2, 64], strides = [1, 1]} : vector<64x64xf32> to vector<2x64xf32>
    %44 = tpu.concatenate %42, %43 in 0 : vector<62x64xf32>, vector<2x64xf32> -> vector<64x64xf32>
    %45 = tpu.concatenate %38, %41, %44 in 1 : vector<64x64xf32>, vector<64x64xf32>, vector<64x64xf32> -> vector<64x192xf32>
    %c0_15 = arith.constant 0 : index
    %c0_16 = arith.constant 0 : index
    %46 = vector.load %arg7[%c0_15, %c0_16] : memref<192x64xf32, #tpu.memory_space<vmem>>, vector<192x64xf32>
    %cst_17 = arith.constant dense<0.000000e+00> : vector<64x64xf32>
    %47 = tpu.matmul %45, %46, %cst_17 {dimension_numbers = #tpu.dot_dimension_numbers<[1], [0], [0], [1], [0, 0, 1, 1], [], []>} : vector<64x192xf32>, vector<192x64xf32>, vector<64x64xf32> -> vector<64x64xf32>
    %c0_18 = arith.constant 0 : index
    %c0_19 = arith.constant 0 : index
    %48 = vector.load %arg8[%c0_18, %c0_19] : memref<1x64xf32, #tpu.memory_space<vmem>>, vector<1x64xf32>
    %49 = vector.broadcast %48 : vector<1x64xf32> to vector<64x64xf32>
    %50 = arith.addf %47, %49 : vector<64x64xf32>
    %c2 = arith.constant 2 : index
    %51 = memref.load %arg9[%c2] : memref<3xf32, #tpu.memory_space<smem>>
    %cst_20 = arith.constant 0.000000e+00 : f32
    %52 = vector.broadcast %cst_20 : f32 to vector<64x64xf32>
    %53 = arith.cmpf ogt, %50, %52 : vector<64x64xf32>
    %54 = vector.broadcast %51 : f32 to vector<64x64xf32>
    %55 = arith.mulf %54, %50 : vector<64x64xf32>
    %56 = arith.select %53, %50, %55 : vector<64x64xi1>, vector<64x64xf32>
    %57 = vector.extract_strided_slice %56 {offsets = [0, 0], sizes = [10, 64], strides = [1, 1]} : vector<64x64xf32> to vector<10x64xf32>
    %cst_21 = arith.constant dense<0xFF800000> : vector<64xf32>
    %58 = vector.multi_reduction <maximumf>, %57, %cst_21 [0] : vector<10x64xf32> to vector<64xf32>
    %59 = vector.shape_cast %58 : vector<64xf32> to vector<1x64xf32>
    %60 = vector.extract_strided_slice %56 {offsets = [16, 0], sizes = [10, 64], strides = [1, 1]} : vector<64x64xf32> to vector<10x64xf32>
    %cst_22 = arith.constant dense<0xFF800000> : vector<64xf32>
    %61 = vector.multi_reduction <maximumf>, %60, %cst_22 [0] : vector<10x64xf32> to vector<64xf32>
    %62 = vector.shape_cast %61 : vector<64xf32> to vector<1x64xf32>
    %63 = tpu.concatenate %59, %62 in 0 : vector<1x64xf32>, vector<1x64xf32> -> vector<2x64xf32>
    %64 = vector.extract_strided_slice %56 {offsets = [32, 0], sizes = [10, 64], strides = [1, 1]} : vector<64x64xf32> to vector<10x64xf32>
    %cst_23 = arith.constant dense<0xFF800000> : vector<64xf32>
    %65 = vector.multi_reduction <maximumf>, %64, %cst_23 [0] : vector<10x64xf32> to vector<64xf32>
    %66 = vector.shape_cast %65 : vector<64xf32> to vector<1x64xf32>
    %67 = vector.extract_strided_slice %56 {offsets = [48, 0], sizes = [10, 64], strides = [1, 1]} : vector<64x64xf32> to vector<10x64xf32>
    %cst_24 = arith.constant dense<0xFF800000> : vector<64xf32>
    %68 = vector.multi_reduction <maximumf>, %67, %cst_24 [0] : vector<10x64xf32> to vector<64xf32>
    %69 = vector.shape_cast %68 : vector<64xf32> to vector<1x64xf32>
    %70 = tpu.concatenate %66, %69 in 0 : vector<1x64xf32>, vector<1x64xf32> -> vector<2x64xf32>
    %c0_25 = arith.constant 0 : index
    %c0_26 = arith.constant 0 : index
    %71 = vector.load %arg10[%c0_25, %c0_26] : memref<64x32xf32, #tpu.memory_space<vmem>>, vector<64x32xf32>
    %cst_27 = arith.constant dense<0.000000e+00> : vector<2x32xf32>
    %72 = tpu.matmul %63, %71, %cst_27 {dimension_numbers = #tpu.dot_dimension_numbers<[1], [0], [0], [1], [0, 0, 1, 1], [], []>} : vector<2x64xf32>, vector<64x32xf32>, vector<2x32xf32> -> vector<2x32xf32>
    %c0_28 = arith.constant 0 : index
    %c0_29 = arith.constant 0 : index
    %73 = vector.load %arg11[%c0_28, %c0_29] : memref<64x32xf32, #tpu.memory_space<vmem>>, vector<64x32xf32>
    %cst_30 = arith.constant dense<0.000000e+00> : vector<2x32xf32>
    %74 = tpu.matmul %70, %73, %cst_30 {dimension_numbers = #tpu.dot_dimension_numbers<[1], [0], [0], [1], [0, 0, 1, 1], [], []>} : vector<2x64xf32>, vector<64x32xf32>, vector<2x32xf32> -> vector<2x32xf32>
    %75 = arith.addf %72, %74 : vector<2x32xf32>
    %c0_31 = arith.constant 0 : index
    %c0_32 = arith.constant 0 : index
    %76 = vector.load %arg12[%c0_31, %c0_32] : memref<1x32xf32, #tpu.memory_space<vmem>>, vector<1x32xf32>
    %77 = vector.broadcast %76 : vector<1x32xf32> to vector<2x32xf32>
    %78 = arith.addf %75, %77 : vector<2x32xf32>
    %79 = math.tanh %78 : vector<2x32xf32>
    %c0_33 = arith.constant 0 : index
    %c0_34 = arith.constant 0 : index
    %80 = vector.load %arg13[%c0_33, %c0_34] : memref<1x32xf32, #tpu.memory_space<vmem>>, vector<1x32xf32>
    %81 = vector.broadcast %80 : vector<1x32xf32> to vector<2x32xf32>
    %82 = arith.mulf %79, %81 : vector<2x32xf32>
    %cst_35 = arith.constant dense<0.000000e+00> : vector<2xf32>
    %83 = vector.multi_reduction <add>, %82, %cst_35 [1] : vector<2x32xf32> to vector<2xf32>
    %84 = vector.shape_cast %83 : vector<2xf32> to vector<2x1xf32>
    %c0_36 = arith.constant 0 : index
    %c0_37 = arith.constant 0 : index
    %85 = vector.load %arg14[%c0_36, %c0_37] : memref<1x1xf32, #tpu.memory_space<vmem>>, vector<1x1xf32>
    %86 = vector.broadcast %85 : vector<1x1xf32> to vector<2x1xf32>
    %87 = arith.addf %84, %86 : vector<2x1xf32>
    %c0_38 = arith.constant 0 : index
    %c0_39 = arith.constant 0 : index
    %88 = vector.load %arg15[%c0_38, %c0_39] : memref<2x1xf32, #tpu.memory_space<vmem>>, vector<2x1xf32>
    tpu.vector_store %arg15[%c0_38, %c0_39], %87 {strides = array<i32>} : memref<2x1xf32, #tpu.memory_space<vmem>>, vector<2x1xf32>,
    return
  }
  func.func @transform_0(%arg0: i32) -> (i32, i32) {
    %c0_i32 = arith.constant 0 : i32
    %c0_i32_0 = arith.constant 0 : i32
    return %arg0, %c0_i32 : i32, i32
  }
  func.func @transform_1(%arg0: i32) -> (i32, i32) {
    %c0_i32 = arith.constant 0 : i32
    %c0_i32_0 = arith.constant 0 : i32
    return %arg0, %c0_i32 : i32, i32
  }
  func.func @transform_2(%arg0: i32) -> (i32, i32) {
    %c0_i32 = arith.constant 0 : i32
    %c0_i32_0 = arith.constant 0 : i32
    %c0_i32_1 = arith.constant 0 : i32
    return %c0_i32, %c0_i32_0 : i32, i32
  }
  func.func @transform_3(%arg0: i32) -> (i32, i32) {
    %c0_i32 = arith.constant 0 : i32
    %c0_i32_0 = arith.constant 0 : i32
    %c0_i32_1 = arith.constant 0 : i32
    return %c0_i32, %c0_i32_0 : i32, i32
  }
  func.func @transform_4(%arg0: i32) -> (i32, i32) {
    %c0_i32 = arith.constant 0 : i32
    %c0_i32_0 = arith.constant 0 : i32
    %c0_i32_1 = arith.constant 0 : i32
    return %c0_i32, %c0_i32_0 : i32, i32
  }
  func.func @transform_5(%arg0: i32) -> (i32, i32) {
    %c0_i32 = arith.constant 0 : i32
    %c0_i32_0 = arith.constant 0 : i32
    %c0_i32_1 = arith.constant 0 : i32
    return %c0_i32, %c0_i32_0 : i32, i32
  }
  func.func @transform_6(%arg0: i32) -> (i32, i32) {
    %c0_i32 = arith.constant 0 : i32
    %c0_i32_0 = arith.constant 0 : i32
    %c0_i32_1 = arith.constant 0 : i32
    return %c0_i32, %c0_i32_0 : i32, i32
  }
  func.func @transform_7(%arg0: i32) -> (i32, i32) {
    %c0_i32 = arith.constant 0 : i32
    %c0_i32_0 = arith.constant 0 : i32
    %c0_i32_1 = arith.constant 0 : i32
    return %c0_i32, %c0_i32_0 : i32, i32
  }
  func.func @transform_8(%arg0: i32) -> i32 {
    %c0_i32 = arith.constant 0 : i32
    %c0_i32_0 = arith.constant 0 : i32
    return %c0_i32 : i32
  }
  func.func @transform_9(%arg0: i32) -> (i32, i32) {
    %c0_i32 = arith.constant 0 : i32
    %c0_i32_0 = arith.constant 0 : i32
    %c0_i32_1 = arith.constant 0 : i32
    return %c0_i32, %c0_i32_0 : i32, i32
  }
  func.func @transform_10(%arg0: i32) -> (i32, i32) {
    %c0_i32 = arith.constant 0 : i32
    %c0_i32_0 = arith.constant 0 : i32
    %c0_i32_1 = arith.constant 0 : i32
    return %c0_i32, %c0_i32_0 : i32, i32
  }
  func.func @transform_11(%arg0: i32) -> (i32, i32) {
    %c0_i32 = arith.constant 0 : i32
    %c0_i32_0 = arith.constant 0 : i32
    %c0_i32_1 = arith.constant 0 : i32
    return %c0_i32, %c0_i32_0 : i32, i32
  }
  func.func @transform_12(%arg0: i32) -> (i32, i32) {
    %c0_i32 = arith.constant 0 : i32
    %c0_i32_0 = arith.constant 0 : i32
    %c0_i32_1 = arith.constant 0 : i32
    return %c0_i32, %c0_i32_0 : i32, i32
  }
  func.func @transform_13(%arg0: i32) -> (i32, i32) {
    %c0_i32 = arith.constant 0 : i32
    %c0_i32_0 = arith.constant 0 : i32
    %c0_i32_1 = arith.constant 0 : i32
    return %c0_i32, %c0_i32_0 : i32, i32
  }
  func.func @transform_14(%arg0: i32) -> (i32, i32) {
    %c0_i32 = arith.constant 0 : i32
    %c0_i32_0 = arith.constant 0 : i32
    return %arg0, %c0_i32 : i32, i32
  }
}

</mosaic_0001>

<llo_original>
// kernel: tpu_custom_call.1
$region0: #{tpu_custom_call.1}
  #allocation0 [shape = 'u32[]', space=smem, size = 0x4, offset = 0x4, fixed_abs, tag = 'smem constant byte address 0x4 - core index']
  #allocation1 [shape = 'u32[72,128]{1,0:T(1,128)}', space=vmem, size = 0x9000, scoped, tag = 'internal scratch']
  #allocation2 [shape = 'f32[1,1]{1,0:T(1,128)S(1)}', space=vmem, size = 0x200, scoped, tag = 'scoped memory for tpu_custom_call.1']
  %s0 = inlined_call_operand.vmem [shape: f32[32,64], index: 0, kind: input, shape index: {}]
  %s1 = inlined_call_operand.vmem [shape: f32[32,64], index: 1, kind: input, shape index: {}]
  %s2 = inlined_call_operand.vmem [shape: f32[192,64], index: 2, kind: input, shape index: {}]
  %s3 = inlined_call_operand.vmem [shape: f32[1,64], index: 3, kind: input, shape index: {}]
  %s4 = inlined_call_operand.vmem [shape: f32[192,64], index: 4, kind: input, shape index: {}]
  %s5 = inlined_call_operand.vmem [shape: f32[1,64], index: 5, kind: input, shape index: {}]
  %s6 = inlined_call_operand.vmem [shape: f32[192,64], index: 6, kind: input, shape index: {}]
  %s7 = inlined_call_operand.vmem [shape: f32[1,64], index: 7, kind: input, shape index: {}]
  %s8 = inlined_call_operand.vmem [shape: f32[3], index: 8, kind: input, shape index: {}]
  %s9 = inlined_call_operand.vmem [shape: f32[64,32], index: 9, kind: input, shape index: {}]
  %s10 = inlined_call_operand.vmem [shape: f32[64,32], index: 10, kind: input, shape index: {}]
  %s11 = inlined_call_operand.vmem [shape: f32[1,32], index: 11, kind: input, shape index: {}]
  %s12 = inlined_call_operand.vmem [shape: f32[1,32], index: 12, kind: input, shape index: {}]
  %s13 = inlined_call_operand.<no memory space> [shape: f32[1,1], index: 13, kind: input, shape index: {}]
  %s14 = inlined_call_operand.vmem [shape: f32[2,1], index: 14, kind: output, shape index: {}]
  %s15 = sld [smem:[#allocation0]]
  $region70: #{tpu_custom_call.1} parent=0
    _
  %s17 = ssub.s32 1, %s15
  %s18 = scalar_select 0, %s17, %s15
  %v19 = vstv %s13
  %20 = vst [vmem:[#allocation2] sm:$0x1] %v19
  $region1: #{tpu_custom_call.1} parent=0
    #allocation3 [shape = 'u8[512]{0}', space=smem, size = 0x200, scoped, tag = 'input window, operand 8, single buffered']
    #allocation4 [shape = 's32[1]{0}', space=sflag, size = 0x4, scoped, tag = 'scoped memory for tpu_custom_call.1']
    %21 = vsyncpa [#allocation4], 0
    // Predicated region
    $region2: #{tpu_custom_call.1} parent=1 // pred_check
      _
    $region3: #{tpu_custom_call.1} parent=1 // pred_check_branch
      %23 = sbr.rel (0) target = $region5
    $region4: #{tpu_custom_call.1} parent=1 // pred_region
      _
    $region5: #{tpu_custom_call.1} parent=1 // pred_fallthru
      _
    // Predicated region
    $region6: #{tpu_custom_call.1} parent=1 // pred_check
      _
    $region7: #{tpu_custom_call.1} parent=1 // pred_check_branch
      %25 = sbr.rel (0) target = $region9
    $region8: #{tpu_custom_call.1} parent=1 // pred_region
      _
    $region9: #{tpu_custom_call.1} parent=1 // pred_fallthru
      _
    // Predicated region
    $region10: #{tpu_custom_call.1} parent=1 // pred_check
      _
    $region11: #{tpu_custom_call.1} parent=1 // pred_check_branch
      %27 = sbr.rel (0) target = $region13
    $region12: #{tpu_custom_call.1} parent=1 // pred_region
      _
    $region13: #{tpu_custom_call.1} parent=1 // pred_fallthru
      _
    // Predicated region
    $region14: #{tpu_custom_call.1} parent=1 // pred_check
      _
    $region15: #{tpu_custom_call.1} parent=1 // pred_check_branch
      %29 = sbr.rel (0) target = $region17
    $region16: #{tpu_custom_call.1} parent=1 // pred_region
      _
    $region17: #{tpu_custom_call.1} parent=1 // pred_fallthru
      _
    // Predicated region
    $region18: #{tpu_custom_call.1} parent=1 // pred_check
      _
    $region19: #{tpu_custom_call.1} parent=1 // pred_check_branch
      %31 = sbr.rel (0) target = $region21
    $region20: #{tpu_custom_call.1} parent=1 // pred_region
      _
    $region21: #{tpu_custom_call.1} parent=1 // pred_fallthru
      _
    // Predicated region
    $region22: #{tpu_custom_call.1} parent=1 // pred_check
      _
    $region23: #{tpu_custom_call.1} parent=1 // pred_check_branch
      %33 = sbr.rel (0) target = $region25
    $region24: #{tpu_custom_call.1} parent=1 // pred_region
      _
    $region25: #{tpu_custom_call.1} parent=1 // pred_fallthru
      _
    // Predicated region
    $region26: #{tpu_custom_call.1} parent=1 // pred_check
      _
    $region27: #{tpu_custom_call.1} parent=1 // pred_check_branch
      %35 = sbr.rel (0) target = $region29
    $region28: #{tpu_custom_call.1} parent=1 // pred_region
      _
    $region29: #{tpu_custom_call.1} parent=1 // pred_fallthru
      _
    // Predicated region
    $region30: #{tpu_custom_call.1} parent=1 // pred_check
      _
    $region31: #{tpu_custom_call.1} parent=1 // pred_check_branch
      %37 = sbr.rel (0) target = $region33
    $region32: #{tpu_custom_call.1} parent=1 // pred_region
      _
    $region33: #{tpu_custom_call.1} parent=1 // pred_fallthru
      _
    // Predicated region
    $region34: #{tpu_custom_call.1} parent=1 // pred_check
      _
    $region35: #{tpu_custom_call.1} parent=1 // pred_check_branch
      %39 = sbr.rel (0) target = $region37
    $region36: #{tpu_custom_call.1} parent=1 // pred_region
      %41 = vsyncadd [#allocation4], 0
      %s43 = sshll.u32 %s8, 4
      %s44 = int_to_ptr.vmem [resolvable:$true] %s43
      %46 = dma.vmem_to_smem %s44, 16, [#allocation3], [#allocation4]
    $region37: #{tpu_custom_call.1} parent=1 // pred_fallthru
      _
    // Predicated region
    $region38: #{tpu_custom_call.1} parent=1 // pred_check
      _
    $region39: #{tpu_custom_call.1} parent=1 // pred_check_branch
      %48 = sbr.rel (0) target = $region41
    $region40: #{tpu_custom_call.1} parent=1 // pred_region
      _
    $region41: #{tpu_custom_call.1} parent=1 // pred_fallthru
      _
    // Predicated region
    $region42: #{tpu_custom_call.1} parent=1 // pred_check
      _
    $region43: #{tpu_custom_call.1} parent=1 // pred_check_branch
      %50 = sbr.rel (0) target = $region45
    $region44: #{tpu_custom_call.1} parent=1 // pred_region
      _
    $region45: #{tpu_custom_call.1} parent=1 // pred_fallthru
      _
    // Predicated region
    $region46: #{tpu_custom_call.1} parent=1 // pred_check
      _
    $region47: #{tpu_custom_call.1} parent=1 // pred_check_branch
      %52 = sbr.rel (0) target = $region49
    $region48: #{tpu_custom_call.1} parent=1 // pred_region
      _
    $region49: #{tpu_custom_call.1} parent=1 // pred_fallthru
      _
    // Predicated region
    $region50: #{tpu_custom_call.1} parent=1 // pred_check
      _
    $region51: #{tpu_custom_call.1} parent=1 // pred_check_branch
      %54 = sbr.rel (0) target = $region53
    $region52: #{tpu_custom_call.1} parent=1 // pred_region
      _
    $region53: #{tpu_custom_call.1} parent=1 // pred_fallthru
      _
    // Predicated region
    $region54: #{tpu_custom_call.1} parent=1 // pred_check
      _
    $region55: #{tpu_custom_call.1} parent=1 // pred_check_branch
      %56 = sbr.rel (0) target = $region57
    $region56: #{tpu_custom_call.1} parent=1 // pred_region
      _
    $region57: #{tpu_custom_call.1} parent=1 // pred_fallthru
      _
    // Predicated region
    $region58: #{tpu_custom_call.1} parent=1 // pred_check
      _
    $region59: #{tpu_custom_call.1} parent=1 // pred_check_branch
      %58 = sbr.rel (0) target = $region61
    $region60: #{tpu_custom_call.1} parent=1 // pred_region
      %60 = dma.done [#allocation4], 16
    $region61: #{tpu_custom_call.1} parent=1 // pred_fallthru
      _
    %61 = sfence
    %v62 = vld [vmem:[%s0] sm:$0xff]
    %v63 = vld [vmem:[%s0 + $0x8] sm:$0xff]
    %v64 = vld [vmem:[%s0 + $0x10] sm:$0xff]
    %v65 = vld [vmem:[%s0 + $0x18] sm:$0xff]
    %v66 = vld [vmem:[%s1] sm:$0xff]
    %v67 = vld [vmem:[%s1 + $0x8] sm:$0xff]
    %v68 = vld [vmem:[%s1 + $0x10] sm:$0xff]
    %v69 = vld [vmem:[%s1 + $0x18] sm:$0xff]
    %vm78 = vcmask 1046528
    %v79 = vrot.slane %v62, 1
    %v80 = vrot.slane %v63, 1
    %v81 = vsel %vm78, %v79, %v80
    %v82 = vrot.slane %v64, 1
    %v83 = vsel %vm78, %v80, %v82
    %v84 = vrot.slane %v65, 1
    %v85 = vsel %vm78, %v82, %v84
    %v86 = vrot.slane %v66, 1
    %v87 = vsel %vm78, %v84, %v86
    %v88 = vrot.slane %v67, 1
    %v89 = vsel %vm78, %v86, %v88
    %v90 = vrot.slane %v68, 1
    %v91 = vsel %vm78, %v88, %v90
    %v92 = vrot.slane %v69, 1
    %v93 = vsel %vm78, %v90, %v92
    %v96 = vsel %vm78, %v92, %v79
    %vm97 = vcmask 1045504
    %v98 = vrot.slane %v62, 2
    %v99 = vrot.slane %v63, 2
    %v100 = vsel %vm97, %v98, %v99
    %v101 = vrot.slane %v64, 2
    %v102 = vsel %vm97, %v99, %v101
    %v103 = vrot.slane %v65, 2
    %v104 = vsel %vm97, %v101, %v103
    %v105 = vrot.slane %v66, 2
    %v106 = vsel %vm97, %v103, %v105
    %v107 = vrot.slane %v67, 2
    %v108 = vsel %vm97, %v105, %v107
    %v109 = vrot.slane %v68, 2
    %v110 = vsel %vm97, %v107, %v109
    %v111 = vrot.slane %v69, 2
    %v112 = vsel %vm97, %v109, %v111
    %v115 = vsel %vm97, %v111, %v98
    %117 = vrot.lane.b32.xlu0 %v81, 64
    %v118 = vpop.permute.xlu0 %117
    %119 = vrot.lane.b32.xlu0 %v83, 64
    %v120 = vpop.permute.xlu0 %119
    %121 = vrot.lane.b32.xlu0 %v85, 64
    %v122 = vpop.permute.xlu0 %121
    %123 = vrot.lane.b32.xlu0 %v87, 64
    %v124 = vpop.permute.xlu0 %123
    %125 = vrot.lane.b32.xlu0 %v89, 64
    %v126 = vpop.permute.xlu0 %125
    %127 = vrot.lane.b32.xlu0 %v91, 64
    %v128 = vpop.permute.xlu0 %127
    %129 = vrot.lane.b32.xlu0 %v93, 64
    %v130 = vpop.permute.xlu0 %129
    %131 = vrot.lane.b32.xlu0 %v96, 64
    %v132 = vpop.permute.xlu0 %131
    %vm141 = vcmask 523264
    %v142 = vsel %vm141, %v62, %v118
    %v143 = vsel %vm141, %v63, %v120
    %v144 = vsel %vm141, %v64, %v122
    %v145 = vsel %vm141, %v65, %v124
    %v146 = vsel %vm141, %v66, %v126
    %v147 = vsel %vm141, %v67, %v128
    %v148 = vsel %vm141, %v68, %v130
    %v149 = vsel %vm141, %v69, %v132
    %v150 = vld [vmem:[%s2] sm:$0xff]
    %v151 = vld [vmem:[%s2 + $0x8] sm:$0xff]
    %v152 = vld [vmem:[%s2 + $0x10] sm:$0xff]
    %v153 = vld [vmem:[%s2 + $0x18] sm:$0xff]
    %v154 = vld [vmem:[%s2 + $0x20] sm:$0xff]
    %v155 = vld [vmem:[%s2 + $0x28] sm:$0xff]
    %v156 = vld [vmem:[%s2 + $0x30] sm:$0xff]
    %v157 = vld [vmem:[%s2 + $0x38] sm:$0xff]
    %v158 = vld [vmem:[%s2 + $0x40] sm:$0xff]
    %v159 = vld [vmem:[%s2 + $0x48] sm:$0xff]
    %v160 = vld [vmem:[%s2 + $0x50] sm:$0xff]
    %v161 = vld [vmem:[%s2 + $0x58] sm:$0xff]
    %v162 = vld [vmem:[%s2 + $0x60] sm:$0xff]
    %v163 = vld [vmem:[%s2 + $0x68] sm:$0xff]
    %v164 = vld [vmem:[%s2 + $0x70] sm:$0xff]
    %v165 = vld [vmem:[%s2 + $0x78] sm:$0xff]
    %v166 = vld [vmem:[%s2 + $0x80] sm:$0xff]
    %v167 = vld [vmem:[%s2 + $0x88] sm:$0xff]
    %v168 = vld [vmem:[%s2 + $0x90] sm:$0xff]
    %v169 = vld [vmem:[%s2 + $0x98] sm:$0xff]
    %v170 = vld [vmem:[%s2 + $0xa0] sm:$0xff]
    %v171 = vld [vmem:[%s2 + $0xa8] sm:$0xff]
    %v172 = vld [vmem:[%s2 + $0xb0] sm:$0xff]
    %v173 = vld [vmem:[%s2 + $0xb8] sm:$0xff]
    %v174 = vld [vmem:[%s3] sm:$0x1]
    %v176 = vperm.slane %v174, 0
    %v178 = vsel %vm141, %v100, 0
    %v180 = vsel %vm141, %v102, 0
    %v182 = vsel %vm141, %v104, 0
    %v184 = vsel %vm141, %v106, 0
    %v186 = vsel %vm141, %v108, 0
    %v188 = vsel %vm141, %v110, 0
    %v190 = vsel %vm141, %v112, 0
    %v193 = vsel %vm141, %v115, 0
    %195 = vmatpush.msra.mxu0 %v165
    %196 = vmatpush.msra.mxu0 %v164
    %197 = vmatpush.msra.mxu0 %v163
    %198 = vmatpush.msra.mxu0 %v162
    %199 = vmatpush.msra.mxu0 %v161
    %200 = vmatpush.msra.mxu0 %v160
    %201 = vmatpush.msra.mxu0 %v159
    %202 = vmatpush.msra.mxu0 %v158
    %203 = vmatpush.msra.mxu0 %v157
    %204 = vmatpush.msra.mxu0 %v156
    %205 = vmatpush.msra.mxu0 %v155
    %206 = vmatpush.msra.mxu0 %v154
    %207 = vmatpush.msra.mxu0 %v153
    %208 = vmatpush.msra.mxu0 %v152
    %209 = vmatpush.msra.mxu0 %v151
    %210 = vmatpush.msra.mxu0 %v150
    %211 = vmatmul.f32.gmra.mxu0 %v142
    %v212 = vpop.f32.mrf.mxu0
    %v213 = vadd.f32 %v176, %v212
    %214 = vmatmul.f32.gmra.mxu0 %v143
    %v215 = vpop.f32.mrf.mxu0
    %v216 = vadd.f32 %v176, %v215
    %217 = vmatmul.f32.gmra.mxu0 %v144
    %v218 = vpop.f32.mrf.mxu0
    %v219 = vadd.f32 %v176, %v218
    %220 = vmatmul.f32.gmra.mxu0 %v145
    %v221 = vpop.f32.mrf.mxu0
    %v222 = vadd.f32 %v176, %v221
    %223 = vmatmul.f32.gmra.mxu0 %v146
    %v224 = vpop.f32.mrf.mxu0
    %v225 = vadd.f32 %v176, %v224
    %226 = vmatmul.f32.gmra.mxu0 %v147
    %v227 = vpop.f32.mrf.mxu0
    %v228 = vadd.f32 %v176, %v227
    %229 = vmatmul.f32.gmra.mxu0 %v148
    %v230 = vpop.f32.mrf.mxu0
    %v231 = vadd.f32 %v176, %v230
    %232 = vmatmul.f32.gmra.mxu0 %v149
    %v233 = vpop.f32.mrf.mxu0
    %v234 = vadd.f32 %v176, %v233
    %235 = vdwg.mxu0
    %236 = vmatpush.msra.mxu0 0.0
    %237 = vmatpush.msra.mxu0 0.0
    %238 = vmatpush.msra.mxu0 0.0
    %239 = vmatpush.msra.mxu0 0.0
    %240 = vmatpush.msra.mxu0 0.0
    %241 = vmatpush.msra.mxu0 0.0
    %242 = vmatpush.msra.mxu0 0.0
    %243 = vmatpush.msra.mxu0 0.0
    %244 = vmatpush.msra.mxu0 %v173
    %245 = vmatpush.msra.mxu0 %v172
    %246 = vmatpush.msra.mxu0 %v171
    %247 = vmatpush.msra.mxu0 %v170
    %248 = vmatpush.msra.mxu0 %v169
    %249 = vmatpush.msra.mxu0 %v168
    %250 = vmatpush.msra.mxu0 %v167
    %251 = vmatpush.msra.mxu0 %v166
    %252 = vmatmul.f32.gmra.mxu0 %v178
    %v253 = vpop.f32.mrf.mxu0
    %v254 = vadd.f32 %v213, %v253
    %255 = vmatmul.f32.gmra.mxu0 %v180
    %v256 = vpop.f32.mrf.mxu0
    %v257 = vadd.f32 %v216, %v256
    %258 = vmatmul.f32.gmra.mxu0 %v182
    %v259 = vpop.f32.mrf.mxu0
    %v260 = vadd.f32 %v219, %v259
    %261 = vmatmul.f32.gmra.mxu0 %v184
    %v262 = vpop.f32.mrf.mxu0
    %v263 = vadd.f32 %v222, %v262
    %264 = vmatmul.f32.gmra.mxu0 %v186
    %v265 = vpop.f32.mrf.mxu0
    %v266 = vadd.f32 %v225, %v265
    %267 = vmatmul.f32.gmra.mxu0 %v188
    %v268 = vpop.f32.mrf.mxu0
    %v269 = vadd.f32 %v228, %v268
    %270 = vmatmul.f32.gmra.mxu0 %v190
    %v271 = vpop.f32.mrf.mxu0
    %v272 = vadd.f32 %v231, %v271
    %273 = vmatmul.f32.gmra.mxu0 %v193
    %v274 = vpop.f32.mrf.mxu0
    %v275 = vadd.f32 %v234, %v274
    %276 = vdwg.mxu0
    %s277 = sld [smem:[#allocation3]]
    %vm278 = vcmp.gt.f32.partialorder %v254, 0.0
    %vm279 = vcmp.gt.f32.partialorder %v257, 0.0
    %vm280 = vcmp.gt.f32.partialorder %v260, 0.0
    %vm281 = vcmp.gt.f32.partialorder %v263, 0.0
    %vm282 = vcmp.gt.f32.partialorder %v266, 0.0
    %vm283 = vcmp.gt.f32.partialorder %v269, 0.0
    %vm284 = vcmp.gt.f32.partialorder %v272, 0.0
    %vm285 = vcmp.gt.f32.partialorder %v275, 0.0
    %v286 = vstv %s277
    %v287 = vmul.f32 %v286, %v254
    %v288 = vmul.f32 %v286, %v257
    %v289 = vmul.f32 %v286, %v260
    %v290 = vmul.f32 %v286, %v263
    %v291 = vmul.f32 %v286, %v266
    %v292 = vmul.f32 %v286, %v269
    %v293 = vmul.f32 %v286, %v272
    %v294 = vmul.f32 %v286, %v275
    %v295 = vsel %vm278, %v254, %v287
    %v296 = vsel %vm279, %v257, %v288
    %v297 = vsel %vm280, %v260, %v289
    %v298 = vsel %vm281, %v263, %v290
    %v299 = vsel %vm282, %v266, %v291
    %v300 = vsel %vm283, %v269, %v292
    %v301 = vsel %vm284, %v272, %v293
    %v302 = vsel %vm285, %v275, %v294
    %v311 = vrot.slane %v295, 1
    %v312 = vrot.slane %v296, 1
    %v313 = vsel %vm78, %v311, %v312
    %v314 = vrot.slane %v297, 1
    %v315 = vsel %vm78, %v312, %v314
    %v316 = vrot.slane %v298, 1
    %v317 = vsel %vm78, %v314, %v316
    %v318 = vrot.slane %v299, 1
    %v319 = vsel %vm78, %v316, %v318
    %v320 = vrot.slane %v300, 1
    %v321 = vsel %vm78, %v318, %v320
    %v322 = vrot.slane %v301, 1
    %v323 = vsel %vm78, %v320, %v322
    %v324 = vrot.slane %v302, 1
    %v325 = vsel %vm78, %v322, %v324
    %v328 = vsel %vm78, %v324, %v311
    %v329 = vrot.slane %v295, 2
    %v330 = vrot.slane %v296, 2
    %v331 = vsel %vm97, %v329, %v330
    %v332 = vrot.slane %v297, 2
    %v333 = vsel %vm97, %v330, %v332
    %v334 = vrot.slane %v298, 2
    %v335 = vsel %vm97, %v332, %v334
    %v336 = vrot.slane %v299, 2
    %v337 = vsel %vm97, %v334, %v336
    %v338 = vrot.slane %v300, 2
    %v339 = vsel %vm97, %v336, %v338
    %v340 = vrot.slane %v301, 2
    %v341 = vsel %vm97, %v338, %v340
    %v342 = vrot.slane %v302, 2
    %v343 = vsel %vm97, %v340, %v342
    %v346 = vsel %vm97, %v342, %v329
    %348 = vrot.lane.b32.xlu0 %v313, 64
    %v349 = vpop.permute.xlu0 %348
    %350 = vrot.lane.b32.xlu0 %v315, 64
    %v351 = vpop.permute.xlu0 %350
    %352 = vrot.lane.b32.xlu0 %v317, 64
    %v353 = vpop.permute.xlu0 %352
    %354 = vrot.lane.b32.xlu0 %v319, 64
    %v355 = vpop.permute.xlu0 %354
    %356 = vrot.lane.b32.xlu0 %v321, 64
    %v357 = vpop.permute.xlu0 %356
    %358 = vrot.lane.b32.xlu0 %v323, 64
    %v359 = vpop.permute.xlu0 %358
    %360 = vrot.lane.b32.xlu0 %v325, 64
    %v361 = vpop.permute.xlu0 %360
    %362 = vrot.lane.b32.xlu0 %v328, 64
    %v363 = vpop.permute.xlu0 %362
    %v372 = vsel %vm141, %v295, %v349
    %v373 = vsel %vm141, %v296, %v351
    %v374 = vsel %vm141, %v297, %v353
    %v375 = vsel %vm141, %v298, %v355
    %v376 = vsel %vm141, %v299, %v357
    %v377 = vsel %vm141, %v300, %v359
    %v378 = vsel %vm141, %v301, %v361
    %v379 = vsel %vm141, %v302, %v363
    %v380 = vld [vmem:[%s4] sm:$0xff]
    %v381 = vld [vmem:[%s4 + $0x8] sm:$0xff]
    %v382 = vld [vmem:[%s4 + $0x10] sm:$0xff]
    %v383 = vld [vmem:[%s4 + $0x18] sm:$0xff]
    %v384 = vld [vmem:[%s4 + $0x20] sm:$0xff]
    %v385 = vld [vmem:[%s4 + $0x28] sm:$0xff]
    %v386 = vld [vmem:[%s4 + $0x30] sm:$0xff]
    %v387 = vld [vmem:[%s4 + $0x38] sm:$0xff]
    %v388 = vld [vmem:[%s4 + $0x40] sm:$0xff]
    %v389 = vld [vmem:[%s4 + $0x48] sm:$0xff]
    %v390 = vld [vmem:[%s4 + $0x50] sm:$0xff]
    %v391 = vld [vmem:[%s4 + $0x58] sm:$0xff]
    %v392 = vld [vmem:[%s4 + $0x60] sm:$0xff]
    %v393 = vld [vmem:[%s4 + $0x68] sm:$0xff]
    %v394 = vld [vmem:[%s4 + $0x70] sm:$0xff]
    %v395 = vld [vmem:[%s4 + $0x78] sm:$0xff]
    %v396 = vld [vmem:[%s4 + $0x80] sm:$0xff]
    %v397 = vld [vmem:[%s4 + $0x88] sm:$0xff]
    %v398 = vld [vmem:[%s4 + $0x90] sm:$0xff]
    %v399 = vld [vmem:[%s4 + $0x98] sm:$0xff]
    %v400 = vld [vmem:[%s4 + $0xa0] sm:$0xff]
    %v401 = vld [vmem:[%s4 + $0xa8] sm:$0xff]
    %v402 = vld [vmem:[%s4 + $0xb0] sm:$0xff]
    %v403 = vld [vmem:[%s4 + $0xb8] sm:$0xff]
    %v404 = vld [vmem:[%s5] sm:$0x1]
    %v406 = vperm.slane %v404, 0
    %v408 = vsel %vm141, %v331, 0
    %v410 = vsel %vm141, %v333, 0
    %v412 = vsel %vm141, %v335, 0
    %v414 = vsel %vm141, %v337, 0
    %v416 = vsel %vm141, %v339, 0
    %v418 = vsel %vm141, %v341, 0
    %v420 = vsel %vm141, %v343, 0
    %v423 = vsel %vm141, %v346, 0
    %425 = vmatpush.msra.mxu0 %v395
    %426 = vmatpush.msra.mxu0 %v394
    %427 = vmatpush.msra.mxu0 %v393
    %428 = vmatpush.msra.mxu0 %v392
    %429 = vmatpush.msra.mxu0 %v391
    %430 = vmatpush.msra.mxu0 %v390
    %431 = vmatpush.msra.mxu0 %v389
    %432 = vmatpush.msra.mxu0 %v388
    %433 = vmatpush.msra.mxu0 %v387
    %434 = vmatpush.msra.mxu0 %v386
    %435 = vmatpush.msra.mxu0 %v385
    %436 = vmatpush.msra.mxu0 %v384
    %437 = vmatpush.msra.mxu0 %v383
    %438 = vmatpush.msra.mxu0 %v382
    %439 = vmatpush.msra.mxu0 %v381
    %440 = vmatpush.msra.mxu0 %v380
    %441 = vmatmul.f32.gmra.mxu0 %v372
    %v442 = vpop.f32.mrf.mxu0
    %v443 = vadd.f32 %v406, %v442
    %444 = vmatmul.f32.gmra.mxu0 %v373
    %v445 = vpop.f32.mrf.mxu0
    %v446 = vadd.f32 %v406, %v445
    %447 = vmatmul.f32.gmra.mxu0 %v374
    %v448 = vpop.f32.mrf.mxu0
    %v449 = vadd.f32 %v406, %v448
    %450 = vmatmul.f32.gmra.mxu0 %v375
    %v451 = vpop.f32.mrf.mxu0
    %v452 = vadd.f32 %v406, %v451
    %453 = vmatmul.f32.gmra.mxu0 %v376
    %v454 = vpop.f32.mrf.mxu0
    %v455 = vadd.f32 %v406, %v454
    %456 = vmatmul.f32.gmra.mxu0 %v377
    %v457 = vpop.f32.mrf.mxu0
    %v458 = vadd.f32 %v406, %v457
    %459 = vmatmul.f32.gmra.mxu0 %v378
    %v460 = vpop.f32.mrf.mxu0
    %v461 = vadd.f32 %v406, %v460
    %462 = vmatmul.f32.gmra.mxu0 %v379
    %v463 = vpop.f32.mrf.mxu0
    %v464 = vadd.f32 %v406, %v463
    %465 = vdwg.mxu0
    %466 = vmatpush.msra.mxu0 0.0
    %467 = vmatpush.msra.mxu0 0.0
    %468 = vmatpush.msra.mxu0 0.0
    %469 = vmatpush.msra.mxu0 0.0
    %470 = vmatpush.msra.mxu0 0.0
    %471 = vmatpush.msra.mxu0 0.0
    %472 = vmatpush.msra.mxu0 0.0
    %473 = vmatpush.msra.mxu0 0.0
    %474 = vmatpush.msra.mxu0 %v403
    %475 = vmatpush.msra.mxu0 %v402
    %476 = vmatpush.msra.mxu0 %v401
    %477 = vmatpush.msra.mxu0 %v400
    %478 = vmatpush.msra.mxu0 %v399
    %479 = vmatpush.msra.mxu0 %v398
    %480 = vmatpush.msra.mxu0 %v397
    %481 = vmatpush.msra.mxu0 %v396
    %482 = vmatmul.f32.gmra.mxu0 %v408
    %v483 = vpop.f32.mrf.mxu0
    %v484 = vadd.f32 %v443, %v483
    %485 = vmatmul.f32.gmra.mxu0 %v410
    %v486 = vpop.f32.mrf.mxu0
    %v487 = vadd.f32 %v446, %v486
    %488 = vmatmul.f32.gmra.mxu0 %v412
    %v489 = vpop.f32.mrf.mxu0
    %v490 = vadd.f32 %v449, %v489
    %491 = vmatmul.f32.gmra.mxu0 %v414
    %v492 = vpop.f32.mrf.mxu0
    %v493 = vadd.f32 %v452, %v492
    %494 = vmatmul.f32.gmra.mxu0 %v416
    %v495 = vpop.f32.mrf.mxu0
    %v496 = vadd.f32 %v455, %v495
    %497 = vmatmul.f32.gmra.mxu0 %v418
    %v498 = vpop.f32.mrf.mxu0
    %v499 = vadd.f32 %v458, %v498
    %500 = vmatmul.f32.gmra.mxu0 %v420
    %v501 = vpop.f32.mrf.mxu0
    %v502 = vadd.f32 %v461, %v501
    %503 = vmatmul.f32.gmra.mxu0 %v423
    %v504 = vpop.f32.mrf.mxu0
    %v505 = vadd.f32 %v464, %v504
    %506 = vdwg.mxu0
    %s507 = sld [smem:[#allocation3 + $0x1]]
    %vm508 = vcmp.gt.f32.partialorder %v484, 0.0
    %vm509 = vcmp.gt.f32.partialorder %v487, 0.0
    %vm510 = vcmp.gt.f32.partialorder %v490, 0.0
    %vm511 = vcmp.gt.f32.partialorder %v493, 0.0
    %vm512 = vcmp.gt.f32.partialorder %v496, 0.0
    %vm513 = vcmp.gt.f32.partialorder %v499, 0.0
    %vm514 = vcmp.gt.f32.partialorder %v502, 0.0
    %vm515 = vcmp.gt.f32.partialorder %v505, 0.0
    %v516 = vstv %s507
    %v517 = vmul.f32 %v516, %v484
    %v518 = vmul.f32 %v516, %v487
    %v519 = vmul.f32 %v516, %v490
    %v520 = vmul.f32 %v516, %v493
    %v521 = vmul.f32 %v516, %v496
    %v522 = vmul.f32 %v516, %v499
    %v523 = vmul.f32 %v516, %v502
    %v524 = vmul.f32 %v516, %v505
    %v525 = vsel %vm508, %v484, %v517
    %v526 = vsel %vm509, %v487, %v518
    %v527 = vsel %vm510, %v490, %v519
    %v528 = vsel %vm511, %v493, %v520
    %v529 = vsel %vm512, %v496, %v521
    %v530 = vsel %vm513, %v499, %v522
    %v531 = vsel %vm514, %v502, %v523
    %v532 = vsel %vm515, %v505, %v524
    %v541 = vrot.slane %v525, 1
    %v542 = vrot.slane %v526, 1
    %v543 = vsel %vm78, %v541, %v542
    %v544 = vrot.slane %v527, 1
    %v545 = vsel %vm78, %v542, %v544
    %v546 = vrot.slane %v528, 1
    %v547 = vsel %vm78, %v544, %v546
    %v548 = vrot.slane %v529, 1
    %v549 = vsel %vm78, %v546, %v548
    %v550 = vrot.slane %v530, 1
    %v551 = vsel %vm78, %v548, %v550
    %v552 = vrot.slane %v531, 1
    %v553 = vsel %vm78, %v550, %v552
    %v554 = vrot.slane %v532, 1
    %v555 = vsel %vm78, %v552, %v554
    %v558 = vsel %vm78, %v554, %v541
    %v559 = vrot.slane %v525, 2
    %v560 = vrot.slane %v526, 2
    %v561 = vsel %vm97, %v559, %v560
    %v562 = vrot.slane %v527, 2
    %v563 = vsel %vm97, %v560, %v562
    %v564 = vrot.slane %v528, 2
    %v565 = vsel %vm97, %v562, %v564
    %v566 = vrot.slane %v529, 2
    %v567 = vsel %vm97, %v564, %v566
    %v568 = vrot.slane %v530, 2
    %v569 = vsel %vm97, %v566, %v568
    %v570 = vrot.slane %v531, 2
    %v571 = vsel %vm97, %v568, %v570
    %v572 = vrot.slane %v532, 2
    %v573 = vsel %vm97, %v570, %v572
    %v576 = vsel %vm97, %v572, %v559
    %578 = vrot.lane.b32.xlu0 %v543, 64
    %v579 = vpop.permute.xlu0 %578
    %580 = vrot.lane.b32.xlu0 %v545, 64
    %v581 = vpop.permute.xlu0 %580
    %582 = vrot.lane.b32.xlu0 %v547, 64
    %v583 = vpop.permute.xlu0 %582
    %584 = vrot.lane.b32.xlu0 %v549, 64
    %v585 = vpop.permute.xlu0 %584
    %586 = vrot.lane.b32.xlu0 %v551, 64
    %v587 = vpop.permute.xlu0 %586
    %588 = vrot.lane.b32.xlu0 %v553, 64
    %v589 = vpop.permute.xlu0 %588
    %590 = vrot.lane.b32.xlu0 %v555, 64
    %v591 = vpop.permute.xlu0 %590
    %592 = vrot.lane.b32.xlu0 %v558, 64
    %v593 = vpop.permute.xlu0 %592
    %v602 = vsel %vm141, %v525, %v579
    %v603 = vsel %vm141, %v526, %v581
    %v604 = vsel %vm141, %v527, %v583
    %v605 = vsel %vm141, %v528, %v585
    %v606 = vsel %vm141, %v529, %v587
    %v607 = vsel %vm141, %v530, %v589
    %v608 = vsel %vm141, %v531, %v591
    %v609 = vsel %vm141, %v532, %v593
    %v610 = vld [vmem:[%s6] sm:$0xff]
    %v611 = vld [vmem:[%s6 + $0x8] sm:$0xff]
    %v612 = vld [vmem:[%s6 + $0x10] sm:$0xff]
    %v613 = vld [vmem:[%s6 + $0x18] sm:$0xff]
    %v614 = vld [vmem:[%s6 + $0x20] sm:$0xff]
    %v615 = vld [vmem:[%s6 + $0x28] sm:$0xff]
    %v616 = vld [vmem:[%s6 + $0x30] sm:$0xff]
    %v617 = vld [vmem:[%s6 + $0x38] sm:$0xff]
    %v618 = vld [vmem:[%s6 + $0x40] sm:$0xff]
    %v619 = vld [vmem:[%s6 + $0x48] sm:$0xff]
    %v620 = vld [vmem:[%s6 + $0x50] sm:$0xff]
    %v621 = vld [vmem:[%s6 + $0x58] sm:$0xff]
    %v622 = vld [vmem:[%s6 + $0x60] sm:$0xff]
    %v623 = vld [vmem:[%s6 + $0x68] sm:$0xff]
    %v624 = vld [vmem:[%s6 + $0x70] sm:$0xff]
    %v625 = vld [vmem:[%s6 + $0x78] sm:$0xff]
    %v626 = vld [vmem:[%s6 + $0x80] sm:$0xff]
    %v627 = vld [vmem:[%s6 + $0x88] sm:$0xff]
    %v628 = vld [vmem:[%s6 + $0x90] sm:$0xff]
    %v629 = vld [vmem:[%s6 + $0x98] sm:$0xff]
    %v630 = vld [vmem:[%s6 + $0xa0] sm:$0xff]
    %v631 = vld [vmem:[%s6 + $0xa8] sm:$0xff]
    %v632 = vld [vmem:[%s6 + $0xb0] sm:$0xff]
    %v633 = vld [vmem:[%s6 + $0xb8] sm:$0xff]
    %v634 = vld [vmem:[%s7] sm:$0x1]
    %v636 = vperm.slane %v634, 0
    %v638 = vsel %vm141, %v561, 0
    %v640 = vsel %vm141, %v563, 0
    %v642 = vsel %vm141, %v565, 0
    %v644 = vsel %vm141, %v567, 0
    %v646 = vsel %vm141, %v569, 0
    %v648 = vsel %vm141, %v571, 0
    %v650 = vsel %vm141, %v573, 0
    %v653 = vsel %vm141, %v576, 0
    %655 = vmatpush.msra.mxu0 %v625
    %656 = vmatpush.msra.mxu0 %v624
    %657 = vmatpush.msra.mxu0 %v623
    %658 = vmatpush.msra.mxu0 %v622
    %659 = vmatpush.msra.mxu0 %v621
    %660 = vmatpush.msra.mxu0 %v620
    %661 = vmatpush.msra.mxu0 %v619
    %662 = vmatpush.msra.mxu0 %v618
    %663 = vmatpush.msra.mxu0 %v617
    %664 = vmatpush.msra.mxu0 %v616
    %665 = vmatpush.msra.mxu0 %v615
    %666 = vmatpush.msra.mxu0 %v614
    %667 = vmatpush.msra.mxu0 %v613
    %668 = vmatpush.msra.mxu0 %v612
    %669 = vmatpush.msra.mxu0 %v611
    %670 = vmatpush.msra.mxu0 %v610
    %671 = vmatmul.f32.gmra.mxu0 %v602
    %v672 = vpop.f32.mrf.mxu0
    %v673 = vadd.f32 %v636, %v672
    %674 = vmatmul.f32.gmra.mxu0 %v603
    %v675 = vpop.f32.mrf.mxu0
    %v676 = vadd.f32 %v636, %v675
    %677 = vmatmul.f32.gmra.mxu0 %v604
    %v678 = vpop.f32.mrf.mxu0
    %v679 = vadd.f32 %v636, %v678
    %680 = vmatmul.f32.gmra.mxu0 %v605
    %v681 = vpop.f32.mrf.mxu0
    %v682 = vadd.f32 %v636, %v681
    %683 = vmatmul.f32.gmra.mxu0 %v606
    %v684 = vpop.f32.mrf.mxu0
    %v685 = vadd.f32 %v636, %v684
    %686 = vmatmul.f32.gmra.mxu0 %v607
    %v687 = vpop.f32.mrf.mxu0
    %v688 = vadd.f32 %v636, %v687
    %689 = vmatmul.f32.gmra.mxu0 %v608
    %v690 = vpop.f32.mrf.mxu0
    %v691 = vadd.f32 %v636, %v690
    %692 = vmatmul.f32.gmra.mxu0 %v609
    %v693 = vpop.f32.mrf.mxu0
    %v694 = vadd.f32 %v636, %v693
    %695 = vdwg.mxu0
    %696 = vmatpush.msra.mxu0 0.0
    %697 = vmatpush.msra.mxu0 0.0
    %698 = vmatpush.msra.mxu0 0.0
    %699 = vmatpush.msra.mxu0 0.0
    %700 = vmatpush.msra.mxu0 0.0
    %701 = vmatpush.msra.mxu0 0.0
    %702 = vmatpush.msra.mxu0 0.0
    %703 = vmatpush.msra.mxu0 0.0
    %704 = vmatpush.msra.mxu0 %v633
    %705 = vmatpush.msra.mxu0 %v632
    %706 = vmatpush.msra.mxu0 %v631
    %707 = vmatpush.msra.mxu0 %v630
    %708 = vmatpush.msra.mxu0 %v629
    %709 = vmatpush.msra.mxu0 %v628
    %710 = vmatpush.msra.mxu0 %v627
    %711 = vmatpush.msra.mxu0 %v626
    %712 = vmatmul.f32.gmra.mxu0 %v638
    %v713 = vpop.f32.mrf.mxu0
    %v714 = vadd.f32 %v673, %v713
    %715 = vmatmul.f32.gmra.mxu0 %v640
    %v716 = vpop.f32.mrf.mxu0
    %v717 = vadd.f32 %v676, %v716
    %718 = vmatmul.f32.gmra.mxu0 %v642
    %v719 = vpop.f32.mrf.mxu0
    %v720 = vadd.f32 %v679, %v719
    %721 = vmatmul.f32.gmra.mxu0 %v644
    %v722 = vpop.f32.mrf.mxu0
    %v723 = vadd.f32 %v682, %v722
    %724 = vmatmul.f32.gmra.mxu0 %v646
    %v725 = vpop.f32.mrf.mxu0
    %v726 = vadd.f32 %v685, %v725
    %727 = vmatmul.f32.gmra.mxu0 %v648
    %v728 = vpop.f32.mrf.mxu0
    %v729 = vadd.f32 %v688, %v728
    %730 = vmatmul.f32.gmra.mxu0 %v650
    %v731 = vpop.f32.mrf.mxu0
    %v732 = vadd.f32 %v691, %v731
    %733 = vmatmul.f32.gmra.mxu0 %v653
    %v734 = vpop.f32.mrf.mxu0
    %v735 = vadd.f32 %v694, %v734
    %736 = vdwg.mxu0
    %s737 = sld [smem:[#allocation3 + $0x2]]
    %vm738 = vcmp.gt.f32.partialorder %v714, 0.0
    %vm739 = vcmp.gt.f32.partialorder %v717, 0.0
    %vm740 = vcmp.gt.f32.partialorder %v720, 0.0
    %vm741 = vcmp.gt.f32.partialorder %v723, 0.0
    %vm742 = vcmp.gt.f32.partialorder %v726, 0.0
    %vm743 = vcmp.gt.f32.partialorder %v729, 0.0
    %vm744 = vcmp.gt.f32.partialorder %v732, 0.0
    %vm745 = vcmp.gt.f32.partialorder %v735, 0.0
    %v746 = vstv %s737
    %v747 = vmul.f32 %v746, %v714
    %v748 = vmul.f32 %v746, %v717
    %v749 = vmul.f32 %v746, %v720
    %v750 = vmul.f32 %v746, %v723
    %v751 = vmul.f32 %v746, %v726
    %v752 = vmul.f32 %v746, %v729
    %v753 = vmul.f32 %v746, %v732
    %v754 = vmul.f32 %v746, %v735
    %v755 = vsel %vm738, %v714, %v747
    %v756 = vsel %vm739, %v717, %v748
    %v757 = vsel %vm740, %v720, %v749
    %v758 = vsel %vm741, %v723, %v750
    %v759 = vsel %vm742, %v726, %v751
    %v760 = vsel %vm743, %v729, %v752
    %v761 = vsel %vm744, %v732, %v753
    %v762 = vsel %vm745, %v735, %v754
    %v763 = vsel %vm141, %v755, -inf
    %vm764 = vcmask 517120
    %v765 = vsel %vm764, %v756, -inf
    %v766 = vmax.f32 %v763, %v765
    %v767 = vrot.slane %v766, 4
    %v768 = vmax.f32 %v766, %v767
    %v769 = vrot.slane %v768, 2
    %v770 = vmax.f32 %v768, %v769
    %v771 = vrot.slane %v770, 1
    %v772 = vmax.f32 %v770, %v771
    %v773 = vsel %vm141, %v757, -inf
    %v774 = vsel %vm764, %v758, -inf
    %v775 = vmax.f32 %v773, %v774
    %v776 = vrot.slane %v775, 4
    %v777 = vmax.f32 %v775, %v776
    %v778 = vrot.slane %v777, 2
    %v779 = vmax.f32 %v777, %v778
    %v780 = vrot.slane %v779, 1
    %v781 = vmax.f32 %v779, %v780
    %vm782 = vcmask 1040384
    %v783 = vsel %vm782, %v772, %v781
    %v784 = vsel %vm141, %v759, -inf
    %v785 = vsel %vm764, %v760, -inf
    %v786 = vmax.f32 %v784, %v785
    %v787 = vrot.slane %v786, 4
    %v788 = vmax.f32 %v786, %v787
    %v789 = vrot.slane %v788, 2
    %v790 = vmax.f32 %v788, %v789
    %v791 = vrot.slane %v790, 1
    %v792 = vmax.f32 %v790, %v791
    %v793 = vsel %vm141, %v761, -inf
    %v794 = vsel %vm764, %v762, -inf
    %v795 = vmax.f32 %v793, %v794
    %v796 = vrot.slane %v795, 4
    %v797 = vmax.f32 %v795, %v796
    %v798 = vrot.slane %v797, 2
    %v799 = vmax.f32 %v797, %v798
    %v800 = vrot.slane %v799, 1
    %v801 = vmax.f32 %v799, %v800
    %v802 = vsel %vm782, %v792, %v801
    %v803 = vld [vmem:[%s9] sm:$0xff]
    %v804 = vld [vmem:[%s9 + $0x8] sm:$0xff]
    %v805 = vld [vmem:[%s9 + $0x10] sm:$0xff]
    %v806 = vld [vmem:[%s9 + $0x18] sm:$0xff]
    %v807 = vld [vmem:[%s9 + $0x20] sm:$0xff]
    %v808 = vld [vmem:[%s9 + $0x28] sm:$0xff]
    %v809 = vld [vmem:[%s9 + $0x30] sm:$0xff]
    %v810 = vld [vmem:[%s9 + $0x38] sm:$0xff]
    %v811 = vld [vmem:[%s10] sm:$0xff]
    %v812 = vld [vmem:[%s10 + $0x8] sm:$0xff]
    %v813 = vld [vmem:[%s10 + $0x10] sm:$0xff]
    %v814 = vld [vmem:[%s10 + $0x18] sm:$0xff]
    %v815 = vld [vmem:[%s10 + $0x20] sm:$0xff]
    %v816 = vld [vmem:[%s10 + $0x28] sm:$0xff]
    %v817 = vld [vmem:[%s10 + $0x30] sm:$0xff]
    %v818 = vld [vmem:[%s10 + $0x38] sm:$0xff]
    %v820 = vsel %vm141, %v802, 0
    %822 = vmatpush.msra.mxu0 0.0
    %823 = vmatpush.msra.mxu0 0.0
    %824 = vmatpush.msra.mxu0 0.0
    %825 = vmatpush.msra.mxu0 0.0
    %826 = vmatpush.msra.mxu0 0.0
    %827 = vmatpush.msra.mxu0 0.0
    %828 = vmatpush.msra.mxu0 0.0
    %829 = vmatpush.msra.mxu0 0.0
    %830 = vmatpush.msra.mxu0 %v818
    %831 = vmatpush.msra.mxu0 %v817
    %832 = vmatpush.msra.mxu0 %v816
    %833 = vmatpush.msra.mxu0 %v815
    %834 = vmatpush.msra.mxu0 %v814
    %835 = vmatpush.msra.mxu0 %v813
    %836 = vmatpush.msra.mxu0 %v812
    %837 = vmatpush.msra.mxu0 %v811
    %838 = vmatmul.f32.gmra.mxu0 %v820
    %v839 = vpop.f32.mrf.mxu0
    %v840 = vadd.f32 0.0, %v839
    %841 = vdwg.mxu0
    %v843 = vsel %vm141, %v783, 0
    %845 = vmatpush.msra.mxu0 0.0
    %846 = vmatpush.msra.mxu0 0.0
    %847 = vmatpush.msra.mxu0 0.0
    %848 = vmatpush.msra.mxu0 0.0
    %849 = vmatpush.msra.mxu0 0.0
    %850 = vmatpush.msra.mxu0 0.0
    %851 = vmatpush.msra.mxu0 0.0
    %852 = vmatpush.msra.mxu0 0.0
    %853 = vmatpush.msra.mxu0 %v810
    %854 = vmatpush.msra.mxu0 %v809
    %855 = vmatpush.msra.mxu0 %v808
    %856 = vmatpush.msra.mxu0 %v807
    %857 = vmatpush.msra.mxu0 %v806
    %858 = vmatpush.msra.mxu0 %v805
    %859 = vmatpush.msra.mxu0 %v804
    %860 = vmatpush.msra.mxu0 %v803
    %861 = vmatmul.f32.gmra.mxu0 %v843
    %v862 = vpop.f32.mrf.mxu0
    %v863 = vadd.f32 %v840, %v862
    %864 = vdwg.mxu0
    %v865 = vld [vmem:[%s11] sm:$0x1]
    %v867 = vperm.slane %v865, 0
    %v869 = vadd.f32 %v863, %v867
    %v870 = vtanh.pop %v869
    %v871 = vld [vmem:[%s12] sm:$0x1]
    %v873 = vperm.slane %v871, 0
    %v875 = vmul.f32 %v870, %v873
    %vm876 = vcmask 254976
    %v877 = vsel %vm876, %v875, 0.0
    %878 = vadd.xlane.f32.xlu0 %v877
    %v879 = vpop.xlane.xlu0 %878
    %v880 = vld [vmem:[#allocation2] sm:$0x1]
    %v882 = vperm.slane %v880, 0
    %v884 = vadd.f32 %v879, %v882
    %vm885 = vcmask 1024
    %886 = vst.msk [vmem:[%s14] sm:$0x3] %vm885, %v884
    // Predicated region
    $region62: #{tpu_custom_call.1} parent=1 // pred_check
      _
    $region63: #{tpu_custom_call.1} parent=1 // pred_check_branch
      %888 = sbr.rel (0) target = $region65
    $region64: #{tpu_custom_call.1} parent=1 // pred_region
      _
    $region65: #{tpu_custom_call.1} parent=1 // pred_fallthru
      _
    // Predicated region
    $region66: #{tpu_custom_call.1} parent=1 // pred_check
      _
    $region67: #{tpu_custom_call.1} parent=1 // pred_check_branch
      %890 = sbr.rel (0) target = $region69
    $region68: #{tpu_custom_call.1} parent=1 // pred_region
      _
    $region69: #{tpu_custom_call.1} parent=1 // pred_fallthru
      _
    %891 = vsyncpa [#allocation4], 1

</llo_original>
